<compile_context>
chip_gen: v6e
topology: v6e:2x2x1
jax: 0.10.0
libtpu: 0.0.40
codegen_flags: <defaults>
</compile_context>

<pallas_src>
import functools
import math

import jax
import jax.numpy as jnp
from jax.experimental import pallas as pl
from jax.experimental.pallas import tpu as pltpu

_MIB = 1024 * 1024
# Useful (unpadded) HBM bytes to move per grid step so the ~0.35 us fixed
# per-step pipeline overhead stays <~10% of each step's DMA time.
_TARGET_USEFUL_BYTES_PER_STEP = 4 * _MIB
_MAX_TILE = 1 << 17
_WIDE_CLASS_THRESHOLD = 8192  # switch to 2-D class tiling above this many classes


def _round_up(x: int, m: int) -> int:
    return ((x + m - 1) // m) * m


def _cdiv(a: int, b: int) -> int:
    return -(-a // b)


def _vmem_budget_and_limit():
    """Per-generation (budget for double-buffered tiles, scoped vmem limit)."""
    cap = None
    try:
        info = pltpu.get_tpu_info()
        cap = getattr(info, "vmem_capacity_bytes", None)
    except Exception:
        cap = None
    if cap is None or cap <= 0:
        return 32 * _MIB, 48 * _MIB      # conservative, safe on every generation
    if cap >= 96 * _MIB:                 # v5e / v6e: 128 MiB physical VMEM
        return 64 * _MIB, 96 * _MIB
    return 40 * _MIB, 48 * _MIB          # v7x-class: 64 MiB physical VMEM


def _pick_tile(total, vmem_bytes_per_unit, useful_bytes_per_unit, budget, *,
               quantum, min_split):
    """Tile `total` units so each grid step moves ~_TARGET useful bytes, fits the
    double-buffered VMEM budget, and (when total is large) yields >= 2 steps so
    the 'parallel' axis can shard across v7x's two TensorCores."""
    if total <= min_split:
        return max(total, 1)                                   # one full-extent block
    vmem_units = budget // max(vmem_bytes_per_unit, 1)
    tgt_units = _TARGET_USEFUL_BYTES_PER_STEP // max(useful_bytes_per_unit, 1)
    tile = min(vmem_units, tgt_units, _MAX_TILE)
    tile = max(quantum, (tile // quantum) * quantum)
    if total <= tile:
        tile = _round_up(_cdiv(total, 2), quantum)             # force >= 2 steps
    return tile


# ---------------------------------------------------------------------------
# Kernels
# ---------------------------------------------------------------------------
def _dm_kernel(x_ref, o_ref, *, num_class: int, scale: float):
    # x_ref: [row_tile, num_class + 1], o_ref: [row_tile, num_class]
    upper = scale * x_ref[:, num_class:num_class + 1]          # [row_tile, 1]
    o_ref[...] = x_ref[:, :num_class] + upper                  # broadcast add


def _dm_kernel_wide(x_ref, up_ref, o_ref):
    # x_ref: [row_tile, class_tile], up_ref: [row_tile, 1], o_ref: same as x_ref
    o_ref[...] = x_ref[...] + up_ref[...]


def _dm_kernel_classes_major(x_ref, o_ref, *, num_class: int, scale: float):
    # Lane-dense layout: classes on sublanes, rows on the 128-lane axis.
    # x_ref: [num_class + 1, col_tile], o_ref: [num_class, col_tile]
    o_ref[...] = x_ref[:num_class, :] + scale * x_ref[num_class:num_class + 1, :]


# ---------------------------------------------------------------------------
# Wrappers
# ---------------------------------------------------------------------------
def dm_forward(inputs: jax.Array, num_class: int, nu: float = 0.9, *,
               row_tile=None, class_tile=None) -> jax.Array:
    """Pallas implementation of DM.forward.

    inputs: float array of shape [..., num_class + 1]
    returns: float array of shape [..., num_class]
    """
    assert inputs.shape[-1] == num_class + 1, "last dim must be num_class + 1"
    lead = inputs.shape[:-1]
    rows = math.prod(lead) if lead else 1
    x2d = inputs.reshape(rows, num_class + 1)
    dt = jnp.dtype(x2d.dtype).itemsize
    budget, limit = _vmem_budget_and_limit()
    # NOTE: scale is baked in as a compile-time constant; a new nu value
    # triggers a recompile (acceptable for a fixed hyperparameter).
    scale = 1.0 - nu

    wide = (class_tile is not None) or (num_class + 1) > _WIDE_CLASS_THRESHOLD

    if not wide:
        in_pad = _round_up(num_class + 1, 128)
        out_pad = _round_up(num_class, 128)
        if row_tile is None:
            row_tile = _pick_tile(
                rows,
                vmem_bytes_per_unit=2 * (in_pad + out_pad) * dt,   # 2x: double buffer
                useful_bytes_per_unit=(2 * num_class + 1) * dt,
                budget=budget, quantum=8, min_split=512)
        grid = (_cdiv(rows, row_tile),)
        out2d = pl.pallas_call(
            functools.partial(_dm_kernel, num_class=num_class, scale=scale),
            out_shape=jax.ShapeDtypeStruct((rows, num_class), x2d.dtype),
            grid_spec=pltpu.PrefetchScalarGridSpec(
                num_scalar_prefetch=0,
                grid=grid,
                in_specs=[pl.BlockSpec((row_tile, num_class + 1), lambda i: (i, 0))],
                out_specs=pl.BlockSpec((row_tile, num_class), lambda i: (i, 0)),
            ),
            compiler_params=pltpu.CompilerParams(
                dimension_semantics=("parallel",),
                vmem_limit_bytes=limit,
            ),
        )(x2d)
    else:
        # 2-D tiling for very wide class counts: tile the class (lane) dim in
        # 128-lane multiples and feed the broadcast column as a [rows, 1] input.
        if class_tile is None:
            class_tile = 2048
        class_tile = min(_round_up(class_tile, 128), _round_up(num_class, 128))
        upper = (scale * x2d[:, num_class:num_class + 1]).astype(x2d.dtype)
        if row_tile is None:
            row_tile = _pick_tile(
                rows,
                vmem_bytes_per_unit=2 * (2 * class_tile + 128) * dt,
                useful_bytes_per_unit=2 * class_tile * dt,
                budget=budget, quantum=8, min_split=512)
        grid = (_cdiv(rows, row_tile), _cdiv(num_class, class_tile))
        out2d = pl.pallas_call(
            _dm_kernel_wide,
            out_shape=jax.ShapeDtypeStruct((rows, num_class), x2d.dtype),
            grid_spec=pltpu.PrefetchScalarGridSpec(
                num_scalar_prefetch=0,
                grid=grid,
                in_specs=[
                    pl.BlockSpec((row_tile, class_tile), lambda i, j: (i, j)),
                    pl.BlockSpec((row_tile, 1), lambda i, j: (i, 0)),
                ],
                out_specs=pl.BlockSpec((row_tile, class_tile), lambda i, j: (i, j)),
            ),
            compiler_params=pltpu.CompilerParams(
                dimension_semantics=("parallel", "parallel"),
                vmem_limit_bytes=limit,
            ),
        )(x2d, upper)

    return out2d.reshape(*lead, num_class)


def dm_forward_classes_major(inputs_t: jax.Array, num_class: int, nu: float = 0.9,
                             *, col_tile=None) -> jax.Array:
    """Lane-dense variant of DM.forward for classes-major data.

    inputs_t: [num_class + 1, cols]  ->  returns [num_class, cols].
    With tiny num_class this layout keeps every load/store lane-dense (rows on
    the 128-lane axis), and the column-`num_class` broadcast becomes a cheap
    sublane broadcast.  Intended for pipelines whose producer/consumer can stay
    in this layout end-to-end; the default dm_forward keeps the module's native
    [..., num_class + 1] layout to avoid extra HBM transpose passes.
    """
    assert inputs_t.ndim == 2 and inputs_t.shape[0] == num_class + 1
    cols = inputs_t.shape[1]
    dt = jnp.dtype(inputs_t.dtype).itemsize
    budget, limit = _vmem_budget_and_limit()
    sub_in = _round_up(num_class + 1, 8)
    sub_out = _round_up(num_class, 8)
    if col_tile is None:
        col_tile = _pick_tile(
            cols,
            vmem_bytes_per_unit=2 * (sub_in + sub_out) * dt,
            useful_bytes_per_unit=(2 * num_class + 1) * dt,
            budget=budget, quantum=128, min_split=1024)
    grid = (_cdiv(cols, col_tile),)
    return pl.pallas_call(
        functools.partial(_dm_kernel_classes_major, num_class=num_class, scale=1.0 - nu),
        out_shape=jax.ShapeDtypeStruct((num_class, cols), inputs_t.dtype),
        grid_spec=pltpu.PrefetchScalarGridSpec(
            num_scalar_prefetch=0,
            grid=grid,
            in_specs=[pl.BlockSpec((num_class + 1, col_tile), lambda i: (0, i))],
            out_specs=pl.BlockSpec((num_class, col_tile), lambda i: (0, i)),
        ),
        compiler_params=pltpu.CompilerParams(
            dimension_semantics=("parallel",),
            vmem_limit_bytes=limit,
        ),
    )(inputs_t)


def dm_reference(inputs: jnp.ndarray, num_class: int, nu: float = 0.9) -> jnp.ndarray:
    upper = (1.0 - nu) * inputs[..., -1:]
    return (inputs + upper)[..., :-1]


if __name__ == "__main__":
    key = jax.random.PRNGKey(0)
    keys = jax.random.split(key, 4)
    num_class, nu = 4, 0.9

    # 1) Small demo shape consistent with the module: [batch, seq, num_class + 1].
    x = jax.random.normal(key, (2, 8, num_class + 1), dtype=jnp.float32)
    out = jax.block_until_ready(dm_forward(x, num_class=num_class, nu=nu))
    ref = dm_reference(x, num_class, nu)
    assert out.shape == (2, 8, num_class), out.shape
    assert jnp.allclose(out, ref, atol=1e-6, rtol=1e-6), "mismatch vs reference"

    # 2) Row count not a multiple of 8 -> masked (ragged) last row block.
    x2 = jax.random.normal(keys[0], (3, 37, num_class + 1), dtype=jnp.float32)
    out2 = jax.block_until_ready(dm_forward(x2, num_class=num_class, nu=nu))
    assert out2.shape == (3, 37, num_class), out2.shape
    assert jnp.allclose(out2, dm_reference(x2, num_class, nu), atol=1e-6, rtol=1e-6)

    # 3) Enough rows (4096) to force >= 2 grid steps (megacore / pipelining path).
    x3 = jax.random.normal(keys[1], (16, 256, num_class + 1), dtype=jnp.float32)
    out3 = jax.block_until_ready(dm_forward(x3, num_class=num_class, nu=nu))
    assert jnp.allclose(out3, dm_reference(x3, num_class, nu), atol=1e-6, rtol=1e-6)

    # 4) Wide-class 2-D tiling path: class axis tiled in 128-lane blocks, ragged
    #    last class block handled by masked stores.
    wide_c = 255
    x4 = jax.random.normal(keys[2], (64, wide_c + 1), dtype=jnp.float32)
    out4 = jax.block_until_ready(dm_forward(x4, num_class=wide_c, nu=nu, class_tile=128))
    assert out4.shape == (64, wide_c), out4.shape
    assert jnp.allclose(out4, dm_reference(x4, wide_c, nu), atol=1e-6, rtol=1e-6)

    # 5) Lane-dense classes-major variant (for fusion-friendly callers).
    x5 = jnp.transpose(x3.reshape(-1, num_class + 1))        # [num_class + 1, rows]
    out5 = jax.block_until_ready(dm_forward_classes_major(x5, num_class=num_class, nu=nu))
    ref5 = jnp.transpose(dm_reference(x3, num_class, nu).reshape(-1, num_class))
    assert out5.shape == ref5.shape, out5.shape
    assert jnp.allclose(out5, ref5, atol=1e-6, rtol=1e-6)

    print("KERNEL_OK")
</pallas_src>

<mosaic_0001>
module attributes {stable_mosaic.version = 11 : i64} {
  func.func @_dm_kernel(%arg0: i32, %arg1: memref<16x5xf32, #tpu.memory_space<vmem>>, %arg2: memref<16x4xf32, #tpu.memory_space<vmem>>) attributes {dimension_semantics = [#tpu.dimension_semantics<parallel>], iteration_bounds = array<i64: 1>, scalar_prefetch = 0 : i64, scratch_operands = 0 : i64, tpu.core_type = #tpu.core_type<tc>, window_params = [{transform_indices = @transform_0, window_bounds = array<i64: 16, 5>}, {transform_indices = @transform_1, window_bounds = array<i64: 16, 4>}]} {
    %c0 = arith.constant 0 : index
    %c4 = arith.constant 4 : index
    %0 = vector.load %arg1[%c0, %c4] : memref<16x5xf32, #tpu.memory_space<vmem>>, vector<16x1xf32>
    %cst = arith.constant 1.000000e-01 : f32
    %1 = vector.broadcast %cst : f32 to vector<16x1xf32>
    %2 = arith.mulf %1, %0 : vector<16x1xf32>
    %c0_0 = arith.constant 0 : index
    %c0_1 = arith.constant 0 : index
    %3 = vector.load %arg1[%c0_0, %c0_1] : memref<16x5xf32, #tpu.memory_space<vmem>>, vector<16x4xf32>
    %4 = vector.broadcast %2 : vector<16x1xf32> to vector<16x4xf32>
    %5 = arith.addf %3, %4 : vector<16x4xf32>
    %c0_2 = arith.constant 0 : index
    %c0_3 = arith.constant 0 : index
    %6 = vector.load %arg2[%c0_2, %c0_3] : memref<16x4xf32, #tpu.memory_space<vmem>>, vector<16x4xf32>
    tpu.vector_store %arg2[%c0_2, %c0_3], %5 {strides = array<i32>} : memref<16x4xf32, #tpu.memory_space<vmem>>, vector<16x4xf32>,
    return
  }
  func.func @transform_0(%arg0: i32) -> (i32, i32) {
    %c0_i32 = arith.constant 0 : i32
    %c0_i32_0 = arith.constant 0 : i32
    return %arg0, %c0_i32 : i32, i32
  }
  func.func @transform_1(%arg0: i32) -> (i32, i32) {
    %c0_i32 = arith.constant 0 : i32
    %c0_i32_0 = arith.constant 0 : i32
    return %arg0, %c0_i32 : i32, i32
  }
}

</mosaic_0001>

<llo_original>
// kernel: tpu_custom_call.1
$region0: #{tpu_custom_call.1}
  #allocation0 [shape = 'u32[]', space=smem, size = 0x4, offset = 0x4, fixed_abs, tag = 'smem constant byte address 0x4 - core index']
  #allocation1 [shape = 'u32[144,128]{1,0:T(1,128)}', space=vmem, size = 0x12000, scoped, tag = 'internal scratch']
  %s0 = inlined_call_operand.vmem [shape: f32[16,5], index: 0, kind: input, shape index: {}]
  %s1 = inlined_call_operand.vmem [shape: f32[16,4], index: 1, kind: output, shape index: {}]
  %s2 = sld [smem:[#allocation0]]
  $region14: #{tpu_custom_call.1} parent=0
    _
  %s4 = ssub.s32 1, %s2
  %s5 = scalar_select 0, %s4, %s2
  // Predicated region
  $region2: #{tpu_custom_call.1} parent=0 // pred_check
    _
  $region3: #{tpu_custom_call.1} parent=0 // pred_check_branch
    %7 = sbr.rel (0) target = $region5
  $region4: #{tpu_custom_call.1} parent=0 // pred_region
    _
  $region5: #{tpu_custom_call.1} parent=0 // pred_fallthru
    _
  %v8 = vld [vmem:[%s0] sm:$0xff]
  %v9 = vld [vmem:[%s0 + $0x8] sm:$0xff]
  %v10 = vmul.f32 %v8, 0.1
  %v11 = vmul.f32 %v9, 0.1
  %13 = vset.pattern.permute.xlu0 4
  %14 = vperm.xlu0 %13, %v10
  %v15 = vpop.permute.xlu0 %14
  %18 = vset.pattern.permute.xlu0 4
  %19 = vperm.xlu0 %18, %v11
  %v20 = vpop.permute.xlu0 %19
  %v22 = vadd.f32 %v8, %v15
  %v23 = vadd.f32 %v9, %v20
  %vm24 = vcmask 31744
  %25 = vst.msk [vmem:[%s1] sm:$0xff] %vm24, %v22
  %26 = vst.msk [vmem:[%s1 + $0x8] sm:$0xff] %vm24, %v23
  // Predicated region
  $region6: #{tpu_custom_call.1} parent=0 // pred_check
    _
  $region7: #{tpu_custom_call.1} parent=0 // pred_check_branch
    %28 = sbr.rel (0) target = $region9
  $region8: #{tpu_custom_call.1} parent=0 // pred_region
    _
  $region9: #{tpu_custom_call.1} parent=0 // pred_fallthru
    _
  // Predicated region
  $region10: #{tpu_custom_call.1} parent=0 // pred_check
    _
  $region11: #{tpu_custom_call.1} parent=0 // pred_check_branch
    %30 = sbr.rel (0) target = $region13
  $region12: #{tpu_custom_call.1} parent=0 // pred_region
    _
  $region13: #{tpu_custom_call.1} parent=0 // pred_fallthru
    _

</llo_original>
